<compile_context>
chip_gen: v7x
topology: tpu7x:2x2x1
jax: 0.10.0
libtpu: 0.0.40
codegen_flags: <defaults>
</compile_context>

<pallas_src>
import functools

import jax
import jax.numpy as jnp
from jax.experimental import pallas as pl
from jax.experimental.pallas import tpu as pltpu


def _dense_conv3x3_kernel(x_ref, w_ref, b_ref, o_ref, xw_ref, *, H, W, C, NB):
    # x_ref : (1, NB, C, H, W)        VMEM  unpadded input block (layer kk)
    # w_ref : (K*C*9,)                SMEM  all layer weights, [k, c, kh, kw] order
    # b_ref : (K,)                    SMEM  all layer biases
    # o_ref : (1, 1, H, NB*(W+2))     VMEM  lane-packed wide output slab
    # xw_ref: (C, H+2, NB*(W+2)+2)    VMEM  zero-padded, lane-packed scratch
    OW = NB * (W + 2)
    kk = pl.program_id(0)

    # In-kernel "same" padding + lane packing (replaces wrapper-side jnp.pad).
    xw_ref[...] = jnp.zeros_like(xw_ref)
    for b in range(NB):
        col = b * (W + 2) + 1
        xw_ref[:, 1:H + 1, col:col + W] = x_ref[0, b]

    bias = b_ref[kk]
    acc0 = jnp.full((H, OW), bias, dtype=jnp.float32)
    wbase = kk * (C * 9)

    def channel_body(c, acc):
        xc = xw_ref[c]                          # (H+2, OW+2), one channel, all images
        for kw in range(3):
            xs = xc[:, kw:kw + OW]              # hoisted kw lane shift, reused over kh
            for kh in range(3):
                wgt = w_ref[wbase + c * 9 + kh * 3 + kw]
                acc = acc + xs[kh:kh + H, :] * wgt
        return acc

    if C <= 16:
        # Small C: fully unrolled (best scheduler visibility).
        acc = acc0
        for c in range(C):
            acc = channel_body(c, acc)
    else:
        # Large C: visible loop keeps code size / vreg pressure bounded.
        acc = jax.lax.fori_loop(0, C, channel_body, acc0)

    o_ref[0, 0, :, :] = acc.astype(o_ref.dtype)


def _pick_n_block(N, C, H, W, vmem_budget_bytes):
    """Largest divisor of N whose blocks fit a conservative VMEM budget
    (conservative enough for v7x's smaller VMEM); stop growing once the packed
    lane width is comfortably past a few vregs."""
    best = 1
    for nb in range(1, N + 1):
        if N % nb:
            continue
        ow = nb * (W + 2)
        need = 4 * (2 * nb * C * H * W          # double-buffered input block
                    + C * (H + 2) * (ow + 2)    # packed/padded VMEM scratch
                    + 2 * H * ow)               # double-buffered output block
        if need > vmem_budget_bytes:
            break
        best = nb
        if ow >= 512:
            break
    return best


def dense_connection_layer(x, weight, bias, *, n_block=None,
                           vmem_budget_bytes=8 * 1024 * 1024):
    """Forward pass of DenseConnectionLayer.

    x:      (K, N, C, H, W) float32  -- x[i] is fed to layer i
    weight: (K, 1, C, 3, 3) float32  -- stacked per-layer Conv2d weights (OIHW)
    bias:   (K, 1)          float32  -- stacked per-layer biases
    returns (K, N, 1, H, W) float32  -- stacked per-layer outputs
    """
    K, N, C, H, W = x.shape
    assert weight.shape == (K, 1, C, 3, 3)
    assert bias.shape == (K, 1)

    if n_block is None:
        n_block = _pick_n_block(N, C, H, W, vmem_budget_bytes)
    assert N % n_block == 0
    gn = N // n_block
    ow = n_block * (W + 2)

    w_flat = weight.reshape(K * C * 9).astype(jnp.float32)   # [k, c, kh, kw] order
    b_flat = bias.reshape(K).astype(jnp.float32)

    kernel = functools.partial(_dense_conv3x3_kernel, H=H, W=W, C=C, NB=n_block)

    out_wide = pl.pallas_call(
        kernel,
        out_shape=jax.ShapeDtypeStruct((K, gn, H, ow), x.dtype),
        grid=(K, gn),
        in_specs=[
            # NB whole images of one layer per grid step; last two block dims
            # equal the full array dims, so the (8,128) rule is satisfied.
            pl.BlockSpec((1, n_block, C, H, W), lambda kk, nn: (kk, nn, 0, 0, 0)),
            pl.BlockSpec(memory_space=pltpu.MemorySpace.SMEM),
            pl.BlockSpec(memory_space=pltpu.MemorySpace.SMEM),
        ],
        out_specs=pl.BlockSpec((1, 1, H, ow), lambda kk, nn: (kk, nn, 0, 0)),
        scratch_shapes=[pltpu.VMEM((C, H + 2, ow + 2), jnp.float32)],
        compiler_params=pltpu.CompilerParams(
            dimension_semantics=("parallel", "parallel")),
    )(x, w_flat, b_flat)

    # Layout plumbing only: unpack the lane-packed wide slab back to NCHW.
    out = out_wide.reshape(K, gn, H, n_block, W + 2)
    out = out.transpose(0, 1, 3, 2, 4)[..., :W]      # (K, gn, NB, H, W)
    return out.reshape(K, N, 1, H, W)


if __name__ == "__main__":
    key = jax.random.PRNGKey(0)
    k_x, k_w, k_b = jax.random.split(key, 3)

    K, N, C, H, W = 3, 2, 4, 16, 16
    x = jax.random.normal(k_x, (K, N, C, H, W), dtype=jnp.float32)

    # Deterministic synthetic parameters (k stacked Conv2d(in_chans=C, out=1, k=3)).
    fan_in = C * 3 * 3
    bound = 1.0 / (fan_in ** 0.5)
    weight = jax.random.uniform(k_w, (K, 1, C, 3, 3), jnp.float32, -bound, bound)
    bias = jax.random.uniform(k_b, (K, 1), jnp.float32, -bound, bound)

    out = dense_connection_layer(x, weight, bias)
    out = jax.block_until_ready(out)

    # Reference check: per-layer conv (same semantics as nn.Conv2d, padding=1).
    refs = []
    for i in range(K):
        r = jax.lax.conv_general_dilated(
            x[i], weight[i], window_strides=(1, 1), padding="SAME",
            dimension_numbers=("NCHW", "OIHW", "NCHW"),
        ) + bias[i].reshape(1, 1, 1, 1)
        refs.append(r)
    ref = jnp.stack(refs)

    assert out.shape == (K, N, 1, H, W)
    assert jnp.allclose(out, ref, atol=1e-5, rtol=1e-5)
    print("KERNEL_OK")
</pallas_src>

<mosaic_0001>
module attributes {stable_mosaic.version = 11 : i64} {
  func.func @_dense_conv3x3_kernel(%arg0: i32, %arg1: i32, %arg2: memref<1x2x4x16x16xf32, #tpu.memory_space<vmem>>, %arg3: memref<108xf32, #tpu.memory_space<smem>>, %arg4: memref<3xf32, #tpu.memory_space<smem>>, %arg5: memref<1x1x16x36xf32, #tpu.memory_space<vmem>>, %arg6: memref<4x18x38xf32, #tpu.memory_space<vmem>>) attributes {dimension_semantics = [#tpu.dimension_semantics<parallel>, #tpu.dimension_semantics<parallel>], iteration_bounds = array<i64: 3, 1>, scalar_prefetch = 0 : i64, scratch_operands = 1 : i64, tpu.core_type = #tpu.core_type<tc>, window_params = [{transform_indices = @transform_0, window_bounds = array<i64: 1, 2, 4, 16, 16>}, {transform_indices = @transform_1, window_bounds = array<i64: 108>}, {transform_indices = @transform_2, window_bounds = array<i64: 3>}, {transform_indices = @transform_3, window_bounds = array<i64: 1, 1, 16, 36>}]} {
    %cst = arith.constant 0.000000e+00 : f32
    %0 = vector.broadcast %cst : f32 to vector<4x18x38xf32>
    %c0 = arith.constant 0 : index
    %c0_0 = arith.constant 0 : index
    %c0_1 = arith.constant 0 : index
    %1 = vector.load %arg6[%c0, %c0_0, %c0_1] : memref<4x18x38xf32, #tpu.memory_space<vmem>>, vector<4x18x38xf32>
    tpu.vector_store %arg6[%c0, %c0_0, %c0_1], %0 {strides = array<i32>} : memref<4x18x38xf32, #tpu.memory_space<vmem>>, vector<4x18x38xf32>,
    %c0_2 = arith.constant 0 : index
    %c0_3 = arith.constant 0 : index
    %c0_4 = arith.constant 0 : index
    %c0_5 = arith.constant 0 : index
    %c0_6 = arith.constant 0 : index
    %2 = vector.load %arg2[%c0_2, %c0_3, %c0_4, %c0_5, %c0_6] : memref<1x2x4x16x16xf32, #tpu.memory_space<vmem>>, vector<1x1x4x16x16xf32>
    %3 = vector.shape_cast %2 : vector<1x1x4x16x16xf32> to vector<4x16x16xf32>
    %c0_7 = arith.constant 0 : index
    %c1 = arith.constant 1 : index
    %c1_8 = arith.constant 1 : index
    %4 = vector.load %arg6[%c0_7, %c1, %c1_8] : memref<4x18x38xf32, #tpu.memory_space<vmem>>, vector<4x16x16xf32>
    tpu.vector_store %arg6[%c0_7, %c1, %c1_8], %3 {strides = array<i32>} : memref<4x18x38xf32, #tpu.memory_space<vmem>>, vector<4x16x16xf32>,
    %c0_9 = arith.constant 0 : index
    %c1_10 = arith.constant 1 : index
    %c0_11 = arith.constant 0 : index
    %c0_12 = arith.constant 0 : index
    %c0_13 = arith.constant 0 : index
    %5 = vector.load %arg2[%c0_9, %c1_10, %c0_11, %c0_12, %c0_13] : memref<1x2x4x16x16xf32, #tpu.memory_space<vmem>>, vector<1x1x4x16x16xf32>
    %6 = vector.shape_cast %5 : vector<1x1x4x16x16xf32> to vector<4x16x16xf32>
    %c0_14 = arith.constant 0 : index
    %c1_15 = arith.constant 1 : index
    %c19 = arith.constant 19 : index
    %7 = vector.load %arg6[%c0_14, %c1_15, %c19] : memref<4x18x38xf32, #tpu.memory_space<vmem>>, vector<4x16x16xf32>
    tpu.vector_store %arg6[%c0_14, %c1_15, %c19], %6 {strides = array<i32>} : memref<4x18x38xf32, #tpu.memory_space<vmem>>, vector<4x16x16xf32>,
    %8 = arith.index_cast %arg0 : i32 to index
    %9 = memref.load %arg4[%8] : memref<3xf32, #tpu.memory_space<smem>>
    %10 = vector.broadcast %9 : f32 to vector<16x36xf32>
    %c36_i32 = arith.constant 36 : i32
    %11 = arith.muli %arg0, %c36_i32 : i32
    %c0_16 = arith.constant 0 : index
    %c0_17 = arith.constant 0 : index
    %c0_18 = arith.constant 0 : index
    %12 = vector.load %arg6[%c0_16, %c0_17, %c0_18] : memref<4x18x38xf32, #tpu.memory_space<vmem>>, vector<1x18x38xf32>
    %13 = vector.shape_cast %12 : vector<1x18x38xf32> to vector<18x38xf32>
    %14 = vector.extract_strided_slice %13 {offsets = [0, 0], sizes = [18, 36], strides = [1, 1]} : vector<18x38xf32> to vector<18x36xf32>
    %c0_i32 = arith.constant 0 : i32
    %15 = arith.addi %11, %c0_i32 : i32
    %c0_i32_19 = arith.constant 0 : i32
    %16 = arith.addi %15, %c0_i32_19 : i32
    %c0_i32_20 = arith.constant 0 : i32
    %17 = arith.addi %16, %c0_i32_20 : i32
    %18 = arith.index_cast %17 : i32 to index
    %19 = memref.load %arg3[%18] : memref<108xf32, #tpu.memory_space<smem>>
    %20 = vector.extract_strided_slice %14 {offsets = [0, 0], sizes = [16, 36], strides = [1, 1]} : vector<18x36xf32> to vector<16x36xf32>
    %21 = vector.broadcast %19 : f32 to vector<16x36xf32>
    %22 = arith.mulf %20, %21 : vector<16x36xf32>
    %23 = arith.addf %10, %22 : vector<16x36xf32>
    %c0_i32_21 = arith.constant 0 : i32
    %24 = arith.addi %11, %c0_i32_21 : i32
    %c3_i32 = arith.constant 3 : i32
    %25 = arith.addi %24, %c3_i32 : i32
    %c0_i32_22 = arith.constant 0 : i32
    %26 = arith.addi %25, %c0_i32_22 : i32
    %27 = arith.index_cast %26 : i32 to index
    %28 = memref.load %arg3[%27] : memref<108xf32, #tpu.memory_space<smem>>
    %29 = vector.extract_strided_slice %14 {offsets = [1, 0], sizes = [16, 36], strides = [1, 1]} : vector<18x36xf32> to vector<16x36xf32>
    %30 = vector.broadcast %28 : f32 to vector<16x36xf32>
    %31 = arith.mulf %29, %30 : vector<16x36xf32>
    %32 = arith.addf %23, %31 : vector<16x36xf32>
    %c0_i32_23 = arith.constant 0 : i32
    %33 = arith.addi %11, %c0_i32_23 : i32
    %c6_i32 = arith.constant 6 : i32
    %34 = arith.addi %33, %c6_i32 : i32
    %c0_i32_24 = arith.constant 0 : i32
    %35 = arith.addi %34, %c0_i32_24 : i32
    %36 = arith.index_cast %35 : i32 to index
    %37 = memref.load %arg3[%36] : memref<108xf32, #tpu.memory_space<smem>>
    %38 = vector.extract_strided_slice %14 {offsets = [2, 0], sizes = [16, 36], strides = [1, 1]} : vector<18x36xf32> to vector<16x36xf32>
    %39 = vector.broadcast %37 : f32 to vector<16x36xf32>
    %40 = arith.mulf %38, %39 : vector<16x36xf32>
    %41 = arith.addf %32, %40 : vector<16x36xf32>
    %42 = vector.extract_strided_slice %13 {offsets = [0, 1], sizes = [18, 36], strides = [1, 1]} : vector<18x38xf32> to vector<18x36xf32>
    %c0_i32_25 = arith.constant 0 : i32
    %43 = arith.addi %11, %c0_i32_25 : i32
    %c0_i32_26 = arith.constant 0 : i32
    %44 = arith.addi %43, %c0_i32_26 : i32
    %c1_i32 = arith.constant 1 : i32
    %45 = arith.addi %44, %c1_i32 : i32
    %46 = arith.index_cast %45 : i32 to index
    %47 = memref.load %arg3[%46] : memref<108xf32, #tpu.memory_space<smem>>
    %48 = vector.extract_strided_slice %42 {offsets = [0, 0], sizes = [16, 36], strides = [1, 1]} : vector<18x36xf32> to vector<16x36xf32>
    %49 = vector.broadcast %47 : f32 to vector<16x36xf32>
    %50 = arith.mulf %48, %49 : vector<16x36xf32>
    %51 = arith.addf %41, %50 : vector<16x36xf32>
    %c0_i32_27 = arith.constant 0 : i32
    %52 = arith.addi %11, %c0_i32_27 : i32
    %c3_i32_28 = arith.constant 3 : i32
    %53 = arith.addi %52, %c3_i32_28 : i32
    %c1_i32_29 = arith.constant 1 : i32
    %54 = arith.addi %53, %c1_i32_29 : i32
    %55 = arith.index_cast %54 : i32 to index
    %56 = memref.load %arg3[%55] : memref<108xf32, #tpu.memory_space<smem>>
    %57 = vector.extract_strided_slice %42 {offsets = [1, 0], sizes = [16, 36], strides = [1, 1]} : vector<18x36xf32> to vector<16x36xf32>
    %58 = vector.broadcast %56 : f32 to vector<16x36xf32>
    %59 = arith.mulf %57, %58 : vector<16x36xf32>
    %60 = arith.addf %51, %59 : vector<16x36xf32>
    %c0_i32_30 = arith.constant 0 : i32
    %61 = arith.addi %11, %c0_i32_30 : i32
    %c6_i32_31 = arith.constant 6 : i32
    %62 = arith.addi %61, %c6_i32_31 : i32
    %c1_i32_32 = arith.constant 1 : i32
    %63 = arith.addi %62, %c1_i32_32 : i32
    %64 = arith.index_cast %63 : i32 to index
    %65 = memref.load %arg3[%64] : memref<108xf32, #tpu.memory_space<smem>>
    %66 = vector.extract_strided_slice %42 {offsets = [2, 0], sizes = [16, 36], strides = [1, 1]} : vector<18x36xf32> to vector<16x36xf32>
    %67 = vector.broadcast %65 : f32 to vector<16x36xf32>
    %68 = arith.mulf %66, %67 : vector<16x36xf32>
    %69 = arith.addf %60, %68 : vector<16x36xf32>
    %70 = vector.extract_strided_slice %13 {offsets = [0, 2], sizes = [18, 36], strides = [1, 1]} : vector<18x38xf32> to vector<18x36xf32>
    %c0_i32_33 = arith.constant 0 : i32
    %71 = arith.addi %11, %c0_i32_33 : i32
    %c0_i32_34 = arith.constant 0 : i32
    %72 = arith.addi %71, %c0_i32_34 : i32
    %c2_i32 = arith.constant 2 : i32
    %73 = arith.addi %72, %c2_i32 : i32
    %74 = arith.index_cast %73 : i32 to index
    %75 = memref.load %arg3[%74] : memref<108xf32, #tpu.memory_space<smem>>
    %76 = vector.extract_strided_slice %70 {offsets = [0, 0], sizes = [16, 36], strides = [1, 1]} : vector<18x36xf32> to vector<16x36xf32>
    %77 = vector.broadcast %75 : f32 to vector<16x36xf32>
    %78 = arith.mulf %76, %77 : vector<16x36xf32>
    %79 = arith.addf %69, %78 : vector<16x36xf32>
    %c0_i32_35 = arith.constant 0 : i32
    %80 = arith.addi %11, %c0_i32_35 : i32
    %c3_i32_36 = arith.constant 3 : i32
    %81 = arith.addi %80, %c3_i32_36 : i32
    %c2_i32_37 = arith.constant 2 : i32
    %82 = arith.addi %81, %c2_i32_37 : i32
    %83 = arith.index_cast %82 : i32 to index
    %84 = memref.load %arg3[%83] : memref<108xf32, #tpu.memory_space<smem>>
    %85 = vector.extract_strided_slice %70 {offsets = [1, 0], sizes = [16, 36], strides = [1, 1]} : vector<18x36xf32> to vector<16x36xf32>
    %86 = vector.broadcast %84 : f32 to vector<16x36xf32>
    %87 = arith.mulf %85, %86 : vector<16x36xf32>
    %88 = arith.addf %79, %87 : vector<16x36xf32>
    %c0_i32_38 = arith.constant 0 : i32
    %89 = arith.addi %11, %c0_i32_38 : i32
    %c6_i32_39 = arith.constant 6 : i32
    %90 = arith.addi %89, %c6_i32_39 : i32
    %c2_i32_40 = arith.constant 2 : i32
    %91 = arith.addi %90, %c2_i32_40 : i32
    %92 = arith.index_cast %91 : i32 to index
    %93 = memref.load %arg3[%92] : memref<108xf32, #tpu.memory_space<smem>>
    %94 = vector.extract_strided_slice %70 {offsets = [2, 0], sizes = [16, 36], strides = [1, 1]} : vector<18x36xf32> to vector<16x36xf32>
    %95 = vector.broadcast %93 : f32 to vector<16x36xf32>
    %96 = arith.mulf %94, %95 : vector<16x36xf32>
    %97 = arith.addf %88, %96 : vector<16x36xf32>
    %c1_41 = arith.constant 1 : index
    %c0_42 = arith.constant 0 : index
    %c0_43 = arith.constant 0 : index
    %98 = vector.load %arg6[%c1_41, %c0_42, %c0_43] : memref<4x18x38xf32, #tpu.memory_space<vmem>>, vector<1x18x38xf32>
    %99 = vector.shape_cast %98 : vector<1x18x38xf32> to vector<18x38xf32>
    %100 = vector.extract_strided_slice %99 {offsets = [0, 0], sizes = [18, 36], strides = [1, 1]} : vector<18x38xf32> to vector<18x36xf32>
    %c9_i32 = arith.constant 9 : i32
    %101 = arith.addi %11, %c9_i32 : i32
    %c0_i32_44 = arith.constant 0 : i32
    %102 = arith.addi %101, %c0_i32_44 : i32
    %c0_i32_45 = arith.constant 0 : i32
    %103 = arith.addi %102, %c0_i32_45 : i32
    %104 = arith.index_cast %103 : i32 to index
    %105 = memref.load %arg3[%104] : memref<108xf32, #tpu.memory_space<smem>>
    %106 = vector.extract_strided_slice %100 {offsets = [0, 0], sizes = [16, 36], strides = [1, 1]} : vector<18x36xf32> to vector<16x36xf32>
    %107 = vector.broadcast %105 : f32 to vector<16x36xf32>
    %108 = arith.mulf %106, %107 : vector<16x36xf32>
    %109 = arith.addf %97, %108 : vector<16x36xf32>
    %c9_i32_46 = arith.constant 9 : i32
    %110 = arith.addi %11, %c9_i32_46 : i32
    %c3_i32_47 = arith.constant 3 : i32
    %111 = arith.addi %110, %c3_i32_47 : i32
    %c0_i32_48 = arith.constant 0 : i32
    %112 = arith.addi %111, %c0_i32_48 : i32
    %113 = arith.index_cast %112 : i32 to index
    %114 = memref.load %arg3[%113] : memref<108xf32, #tpu.memory_space<smem>>
    %115 = vector.extract_strided_slice %100 {offsets = [1, 0], sizes = [16, 36], strides = [1, 1]} : vector<18x36xf32> to vector<16x36xf32>
    %116 = vector.broadcast %114 : f32 to vector<16x36xf32>
    %117 = arith.mulf %115, %116 : vector<16x36xf32>
    %118 = arith.addf %109, %117 : vector<16x36xf32>
    %c9_i32_49 = arith.constant 9 : i32
    %119 = arith.addi %11, %c9_i32_49 : i32
    %c6_i32_50 = arith.constant 6 : i32
    %120 = arith.addi %119, %c6_i32_50 : i32
    %c0_i32_51 = arith.constant 0 : i32
    %121 = arith.addi %120, %c0_i32_51 : i32
    %122 = arith.index_cast %121 : i32 to index
    %123 = memref.load %arg3[%122] : memref<108xf32, #tpu.memory_space<smem>>
    %124 = vector.extract_strided_slice %100 {offsets = [2, 0], sizes = [16, 36], strides = [1, 1]} : vector<18x36xf32> to vector<16x36xf32>
    %125 = vector.broadcast %123 : f32 to vector<16x36xf32>
    %126 = arith.mulf %124, %125 : vector<16x36xf32>
    %127 = arith.addf %118, %126 : vector<16x36xf32>
    %128 = vector.extract_strided_slice %99 {offsets = [0, 1], sizes = [18, 36], strides = [1, 1]} : vector<18x38xf32> to vector<18x36xf32>
    %c9_i32_52 = arith.constant 9 : i32
    %129 = arith.addi %11, %c9_i32_52 : i32
    %c0_i32_53 = arith.constant 0 : i32
    %130 = arith.addi %129, %c0_i32_53 : i32
    %c1_i32_54 = arith.constant 1 : i32
    %131 = arith.addi %130, %c1_i32_54 : i32
    %132 = arith.index_cast %131 : i32 to index
    %133 = memref.load %arg3[%132] : memref<108xf32, #tpu.memory_space<smem>>
    %134 = vector.extract_strided_slice %128 {offsets = [0, 0], sizes = [16, 36], strides = [1, 1]} : vector<18x36xf32> to vector<16x36xf32>
    %135 = vector.broadcast %133 : f32 to vector<16x36xf32>
    %136 = arith.mulf %134, %135 : vector<16x36xf32>
    %137 = arith.addf %127, %136 : vector<16x36xf32>
    %c9_i32_55 = arith.constant 9 : i32
    %138 = arith.addi %11, %c9_i32_55 : i32
    %c3_i32_56 = arith.constant 3 : i32
    %139 = arith.addi %138, %c3_i32_56 : i32
    %c1_i32_57 = arith.constant 1 : i32
    %140 = arith.addi %139, %c1_i32_57 : i32
    %141 = arith.index_cast %140 : i32 to index
    %142 = memref.load %arg3[%141] : memref<108xf32, #tpu.memory_space<smem>>
    %143 = vector.extract_strided_slice %128 {offsets = [1, 0], sizes = [16, 36], strides = [1, 1]} : vector<18x36xf32> to vector<16x36xf32>
    %144 = vector.broadcast %142 : f32 to vector<16x36xf32>
    %145 = arith.mulf %143, %144 : vector<16x36xf32>
    %146 = arith.addf %137, %145 : vector<16x36xf32>
    %c9_i32_58 = arith.constant 9 : i32
    %147 = arith.addi %11, %c9_i32_58 : i32
    %c6_i32_59 = arith.constant 6 : i32
    %148 = arith.addi %147, %c6_i32_59 : i32
    %c1_i32_60 = arith.constant 1 : i32
    %149 = arith.addi %148, %c1_i32_60 : i32
    %150 = arith.index_cast %149 : i32 to index
    %151 = memref.load %arg3[%150] : memref<108xf32, #tpu.memory_space<smem>>
    %152 = vector.extract_strided_slice %128 {offsets = [2, 0], sizes = [16, 36], strides = [1, 1]} : vector<18x36xf32> to vector<16x36xf32>
    %153 = vector.broadcast %151 : f32 to vector<16x36xf32>
    %154 = arith.mulf %152, %153 : vector<16x36xf32>
    %155 = arith.addf %146, %154 : vector<16x36xf32>
    %156 = vector.extract_strided_slice %99 {offsets = [0, 2], sizes = [18, 36], strides = [1, 1]} : vector<18x38xf32> to vector<18x36xf32>
    %c9_i32_61 = arith.constant 9 : i32
    %157 = arith.addi %11, %c9_i32_61 : i32
    %c0_i32_62 = arith.constant 0 : i32
    %158 = arith.addi %157, %c0_i32_62 : i32
    %c2_i32_63 = arith.constant 2 : i32
    %159 = arith.addi %158, %c2_i32_63 : i32
    %160 = arith.index_cast %159 : i32 to index
    %161 = memref.load %arg3[%160] : memref<108xf32, #tpu.memory_space<smem>>
    %162 = vector.extract_strided_slice %156 {offsets = [0, 0], sizes = [16, 36], strides = [1, 1]} : vector<18x36xf32> to vector<16x36xf32>
    %163 = vector.broadcast %161 : f32 to vector<16x36xf32>
    %164 = arith.mulf %162, %163 : vector<16x36xf32>
    %165 = arith.addf %155, %164 : vector<16x36xf32>
    %c9_i32_64 = arith.constant 9 : i32
    %166 = arith.addi %11, %c9_i32_64 : i32
    %c3_i32_65 = arith.constant 3 : i32
    %167 = arith.addi %166, %c3_i32_65 : i32
    %c2_i32_66 = arith.constant 2 : i32
    %168 = arith.addi %167, %c2_i32_66 : i32
    %169 = arith.index_cast %168 : i32 to index
    %170 = memref.load %arg3[%169] : memref<108xf32, #tpu.memory_space<smem>>
    %171 = vector.extract_strided_slice %156 {offsets = [1, 0], sizes = [16, 36], strides = [1, 1]} : vector<18x36xf32> to vector<16x36xf32>
    %172 = vector.broadcast %170 : f32 to vector<16x36xf32>
    %173 = arith.mulf %171, %172 : vector<16x36xf32>
    %174 = arith.addf %165, %173 : vector<16x36xf32>
    %c9_i32_67 = arith.constant 9 : i32
    %175 = arith.addi %11, %c9_i32_67 : i32
    %c6_i32_68 = arith.constant 6 : i32
    %176 = arith.addi %175, %c6_i32_68 : i32
    %c2_i32_69 = arith.constant 2 : i32
    %177 = arith.addi %176, %c2_i32_69 : i32
    %178 = arith.index_cast %177 : i32 to index
    %179 = memref.load %arg3[%178] : memref<108xf32, #tpu.memory_space<smem>>
    %180 = vector.extract_strided_slice %156 {offsets = [2, 0], sizes = [16, 36], strides = [1, 1]} : vector<18x36xf32> to vector<16x36xf32>
    %181 = vector.broadcast %179 : f32 to vector<16x36xf32>
    %182 = arith.mulf %180, %181 : vector<16x36xf32>
    %183 = arith.addf %174, %182 : vector<16x36xf32>
    %c2 = arith.constant 2 : index
    %c0_70 = arith.constant 0 : index
    %c0_71 = arith.constant 0 : index
    %184 = vector.load %arg6[%c2, %c0_70, %c0_71] : memref<4x18x38xf32, #tpu.memory_space<vmem>>, vector<1x18x38xf32>
    %185 = vector.shape_cast %184 : vector<1x18x38xf32> to vector<18x38xf32>
    %186 = vector.extract_strided_slice %185 {offsets = [0, 0], sizes = [18, 36], strides = [1, 1]} : vector<18x38xf32> to vector<18x36xf32>
    %c18_i32 = arith.constant 18 : i32
    %187 = arith.addi %11, %c18_i32 : i32
    %c0_i32_72 = arith.constant 0 : i32
    %188 = arith.addi %187, %c0_i32_72 : i32
    %c0_i32_73 = arith.constant 0 : i32
    %189 = arith.addi %188, %c0_i32_73 : i32
    %190 = arith.index_cast %189 : i32 to index
    %191 = memref.load %arg3[%190] : memref<108xf32, #tpu.memory_space<smem>>
    %192 = vector.extract_strided_slice %186 {offsets = [0, 0], sizes = [16, 36], strides = [1, 1]} : vector<18x36xf32> to vector<16x36xf32>
    %193 = vector.broadcast %191 : f32 to vector<16x36xf32>
    %194 = arith.mulf %192, %193 : vector<16x36xf32>
    %195 = arith.addf %183, %194 : vector<16x36xf32>
    %c18_i32_74 = arith.constant 18 : i32
    %196 = arith.addi %11, %c18_i32_74 : i32
    %c3_i32_75 = arith.constant 3 : i32
    %197 = arith.addi %196, %c3_i32_75 : i32
    %c0_i32_76 = arith.constant 0 : i32
    %198 = arith.addi %197, %c0_i32_76 : i32
    %199 = arith.index_cast %198 : i32 to index
    %200 = memref.load %arg3[%199] : memref<108xf32, #tpu.memory_space<smem>>
    %201 = vector.extract_strided_slice %186 {offsets = [1, 0], sizes = [16, 36], strides = [1, 1]} : vector<18x36xf32> to vector<16x36xf32>
    %202 = vector.broadcast %200 : f32 to vector<16x36xf32>
    %203 = arith.mulf %201, %202 : vector<16x36xf32>
    %204 = arith.addf %195, %203 : vector<16x36xf32>
    %c18_i32_77 = arith.constant 18 : i32
    %205 = arith.addi %11, %c18_i32_77 : i32
    %c6_i32_78 = arith.constant 6 : i32
    %206 = arith.addi %205, %c6_i32_78 : i32
    %c0_i32_79 = arith.constant 0 : i32
    %207 = arith.addi %206, %c0_i32_79 : i32
    %208 = arith.index_cast %207 : i32 to index
    %209 = memref.load %arg3[%208] : memref<108xf32, #tpu.memory_space<smem>>
    %210 = vector.extract_strided_slice %186 {offsets = [2, 0], sizes = [16, 36], strides = [1, 1]} : vector<18x36xf32> to vector<16x36xf32>
    %211 = vector.broadcast %209 : f32 to vector<16x36xf32>
    %212 = arith.mulf %210, %211 : vector<16x36xf32>
    %213 = arith.addf %204, %212 : vector<16x36xf32>
    %214 = vector.extract_strided_slice %185 {offsets = [0, 1], sizes = [18, 36], strides = [1, 1]} : vector<18x38xf32> to vector<18x36xf32>
    %c18_i32_80 = arith.constant 18 : i32
    %215 = arith.addi %11, %c18_i32_80 : i32
    %c0_i32_81 = arith.constant 0 : i32
    %216 = arith.addi %215, %c0_i32_81 : i32
    %c1_i32_82 = arith.constant 1 : i32
    %217 = arith.addi %216, %c1_i32_82 : i32
    %218 = arith.index_cast %217 : i32 to index
    %219 = memref.load %arg3[%218] : memref<108xf32, #tpu.memory_space<smem>>
    %220 = vector.extract_strided_slice %214 {offsets = [0, 0], sizes = [16, 36], strides = [1, 1]} : vector<18x36xf32> to vector<16x36xf32>
    %221 = vector.broadcast %219 : f32 to vector<16x36xf32>
    %222 = arith.mulf %220, %221 : vector<16x36xf32>
    %223 = arith.addf %213, %222 : vector<16x36xf32>
    %c18_i32_83 = arith.constant 18 : i32
    %224 = arith.addi %11, %c18_i32_83 : i32
    %c3_i32_84 = arith.constant 3 : i32
    %225 = arith.addi %224, %c3_i32_84 : i32
    %c1_i32_85 = arith.constant 1 : i32
    %226 = arith.addi %225, %c1_i32_85 : i32
    %227 = arith.index_cast %226 : i32 to index
    %228 = memref.load %arg3[%227] : memref<108xf32, #tpu.memory_space<smem>>
    %229 = vector.extract_strided_slice %214 {offsets = [1, 0], sizes = [16, 36], strides = [1, 1]} : vector<18x36xf32> to vector<16x36xf32>
    %230 = vector.broadcast %228 : f32 to vector<16x36xf32>
    %231 = arith.mulf %229, %230 : vector<16x36xf32>
    %232 = arith.addf %223, %231 : vector<16x36xf32>
    %c18_i32_86 = arith.constant 18 : i32
    %233 = arith.addi %11, %c18_i32_86 : i32
    %c6_i32_87 = arith.constant 6 : i32
    %234 = arith.addi %233, %c6_i32_87 : i32
    %c1_i32_88 = arith.constant 1 : i32
    %235 = arith.addi %234, %c1_i32_88 : i32
    %236 = arith.index_cast %235 : i32 to index
    %237 = memref.load %arg3[%236] : memref<108xf32, #tpu.memory_space<smem>>
    %238 = vector.extract_strided_slice %214 {offsets = [2, 0], sizes = [16, 36], strides = [1, 1]} : vector<18x36xf32> to vector<16x36xf32>
    %239 = vector.broadcast %237 : f32 to vector<16x36xf32>
    %240 = arith.mulf %238, %239 : vector<16x36xf32>
    %241 = arith.addf %232, %240 : vector<16x36xf32>
    %242 = vector.extract_strided_slice %185 {offsets = [0, 2], sizes = [18, 36], strides = [1, 1]} : vector<18x38xf32> to vector<18x36xf32>
    %c18_i32_89 = arith.constant 18 : i32
    %243 = arith.addi %11, %c18_i32_89 : i32
    %c0_i32_90 = arith.constant 0 : i32
    %244 = arith.addi %243, %c0_i32_90 : i32
    %c2_i32_91 = arith.constant 2 : i32
    %245 = arith.addi %244, %c2_i32_91 : i32
    %246 = arith.index_cast %245 : i32 to index
    %247 = memref.load %arg3[%246] : memref<108xf32, #tpu.memory_space<smem>>
    %248 = vector.extract_strided_slice %242 {offsets = [0, 0], sizes = [16, 36], strides = [1, 1]} : vector<18x36xf32> to vector<16x36xf32>
    %249 = vector.broadcast %247 : f32 to vector<16x36xf32>
    %250 = arith.mulf %248, %249 : vector<16x36xf32>
    %251 = arith.addf %241, %250 : vector<16x36xf32>
    %c18_i32_92 = arith.constant 18 : i32
    %252 = arith.addi %11, %c18_i32_92 : i32
    %c3_i32_93 = arith.constant 3 : i32
    %253 = arith.addi %252, %c3_i32_93 : i32
    %c2_i32_94 = arith.constant 2 : i32
    %254 = arith.addi %253, %c2_i32_94 : i32
    %255 = arith.index_cast %254 : i32 to index
    %256 = memref.load %arg3[%255] : memref<108xf32, #tpu.memory_space<smem>>
    %257 = vector.extract_strided_slice %242 {offsets = [1, 0], sizes = [16, 36], strides = [1, 1]} : vector<18x36xf32> to vector<16x36xf32>
    %258 = vector.broadcast %256 : f32 to vector<16x36xf32>
    %259 = arith.mulf %257, %258 : vector<16x36xf32>
    %260 = arith.addf %251, %259 : vector<16x36xf32>
    %c18_i32_95 = arith.constant 18 : i32
    %261 = arith.addi %11, %c18_i32_95 : i32
    %c6_i32_96 = arith.constant 6 : i32
    %262 = arith.addi %261, %c6_i32_96 : i32
    %c2_i32_97 = arith.constant 2 : i32
    %263 = arith.addi %262, %c2_i32_97 : i32
    %264 = arith.index_cast %263 : i32 to index
    %265 = memref.load %arg3[%264] : memref<108xf32, #tpu.memory_space<smem>>
    %266 = vector.extract_strided_slice %242 {offsets = [2, 0], sizes = [16, 36], strides = [1, 1]} : vector<18x36xf32> to vector<16x36xf32>
    %267 = vector.broadcast %265 : f32 to vector<16x36xf32>
    %268 = arith.mulf %266, %267 : vector<16x36xf32>
    %269 = arith.addf %260, %268 : vector<16x36xf32>
    %c3 = arith.constant 3 : index
    %c0_98 = arith.constant 0 : index
    %c0_99 = arith.constant 0 : index
    %270 = vector.load %arg6[%c3, %c0_98, %c0_99] : memref<4x18x38xf32, #tpu.memory_space<vmem>>, vector<1x18x38xf32>
    %271 = vector.shape_cast %270 : vector<1x18x38xf32> to vector<18x38xf32>
    %272 = vector.extract_strided_slice %271 {offsets = [0, 0], sizes = [18, 36], strides = [1, 1]} : vector<18x38xf32> to vector<18x36xf32>
    %c27_i32 = arith.constant 27 : i32
    %273 = arith.addi %11, %c27_i32 : i32
    %c0_i32_100 = arith.constant 0 : i32
    %274 = arith.addi %273, %c0_i32_100 : i32
    %c0_i32_101 = arith.constant 0 : i32
    %275 = arith.addi %274, %c0_i32_101 : i32
    %276 = arith.index_cast %275 : i32 to index
    %277 = memref.load %arg3[%276] : memref<108xf32, #tpu.memory_space<smem>>
    %278 = vector.extract_strided_slice %272 {offsets = [0, 0], sizes = [16, 36], strides = [1, 1]} : vector<18x36xf32> to vector<16x36xf32>
    %279 = vector.broadcast %277 : f32 to vector<16x36xf32>
    %280 = arith.mulf %278, %279 : vector<16x36xf32>
    %281 = arith.addf %269, %280 : vector<16x36xf32>
    %c27_i32_102 = arith.constant 27 : i32
    %282 = arith.addi %11, %c27_i32_102 : i32
    %c3_i32_103 = arith.constant 3 : i32
    %283 = arith.addi %282, %c3_i32_103 : i32
    %c0_i32_104 = arith.constant 0 : i32
    %284 = arith.addi %283, %c0_i32_104 : i32
    %285 = arith.index_cast %284 : i32 to index
    %286 = memref.load %arg3[%285] : memref<108xf32, #tpu.memory_space<smem>>
    %287 = vector.extract_strided_slice %272 {offsets = [1, 0], sizes = [16, 36], strides = [1, 1]} : vector<18x36xf32> to vector<16x36xf32>
    %288 = vector.broadcast %286 : f32 to vector<16x36xf32>
    %289 = arith.mulf %287, %288 : vector<16x36xf32>
    %290 = arith.addf %281, %289 : vector<16x36xf32>
    %c27_i32_105 = arith.constant 27 : i32
    %291 = arith.addi %11, %c27_i32_105 : i32
    %c6_i32_106 = arith.constant 6 : i32
    %292 = arith.addi %291, %c6_i32_106 : i32
    %c0_i32_107 = arith.constant 0 : i32
    %293 = arith.addi %292, %c0_i32_107 : i32
    %294 = arith.index_cast %293 : i32 to index
    %295 = memref.load %arg3[%294] : memref<108xf32, #tpu.memory_space<smem>>
    %296 = vector.extract_strided_slice %272 {offsets = [2, 0], sizes = [16, 36], strides = [1, 1]} : vector<18x36xf32> to vector<16x36xf32>
    %297 = vector.broadcast %295 : f32 to vector<16x36xf32>
    %298 = arith.mulf %296, %297 : vector<16x36xf32>
    %299 = arith.addf %290, %298 : vector<16x36xf32>
    %300 = vector.extract_strided_slice %271 {offsets = [0, 1], sizes = [18, 36], strides = [1, 1]} : vector<18x38xf32> to vector<18x36xf32>
    %c27_i32_108 = arith.constant 27 : i32
    %301 = arith.addi %11, %c27_i32_108 : i32
    %c0_i32_109 = arith.constant 0 : i32
    %302 = arith.addi %301, %c0_i32_109 : i32
    %c1_i32_110 = arith.constant 1 : i32
    %303 = arith.addi %302, %c1_i32_110 : i32
    %304 = arith.index_cast %303 : i32 to index
    %305 = memref.load %arg3[%304] : memref<108xf32, #tpu.memory_space<smem>>
    %306 = vector.extract_strided_slice %300 {offsets = [0, 0], sizes = [16, 36], strides = [1, 1]} : vector<18x36xf32> to vector<16x36xf32>
    %307 = vector.broadcast %305 : f32 to vector<16x36xf32>
    %308 = arith.mulf %306, %307 : vector<16x36xf32>
    %309 = arith.addf %299, %308 : vector<16x36xf32>
    %c27_i32_111 = arith.constant 27 : i32
    %310 = arith.addi %11, %c27_i32_111 : i32
    %c3_i32_112 = arith.constant 3 : i32
    %311 = arith.addi %310, %c3_i32_112 : i32
    %c1_i32_113 = arith.constant 1 : i32
    %312 = arith.addi %311, %c1_i32_113 : i32
    %313 = arith.index_cast %312 : i32 to index
    %314 = memref.load %arg3[%313] : memref<108xf32, #tpu.memory_space<smem>>
    %315 = vector.extract_strided_slice %300 {offsets = [1, 0], sizes = [16, 36], strides = [1, 1]} : vector<18x36xf32> to vector<16x36xf32>
    %316 = vector.broadcast %314 : f32 to vector<16x36xf32>
    %317 = arith.mulf %315, %316 : vector<16x36xf32>
    %318 = arith.addf %309, %317 : vector<16x36xf32>
    %c27_i32_114 = arith.constant 27 : i32
    %319 = arith.addi %11, %c27_i32_114 : i32
    %c6_i32_115 = arith.constant 6 : i32
    %320 = arith.addi %319, %c6_i32_115 : i32
    %c1_i32_116 = arith.constant 1 : i32
    %321 = arith.addi %320, %c1_i32_116 : i32
    %322 = arith.index_cast %321 : i32 to index
    %323 = memref.load %arg3[%322] : memref<108xf32, #tpu.memory_space<smem>>
    %324 = vector.extract_strided_slice %300 {offsets = [2, 0], sizes = [16, 36], strides = [1, 1]} : vector<18x36xf32> to vector<16x36xf32>
    %325 = vector.broadcast %323 : f32 to vector<16x36xf32>
    %326 = arith.mulf %324, %325 : vector<16x36xf32>
    %327 = arith.addf %318, %326 : vector<16x36xf32>
    %328 = vector.extract_strided_slice %271 {offsets = [0, 2], sizes = [18, 36], strides = [1, 1]} : vector<18x38xf32> to vector<18x36xf32>
    %c27_i32_117 = arith.constant 27 : i32
    %329 = arith.addi %11, %c27_i32_117 : i32
    %c0_i32_118 = arith.constant 0 : i32
    %330 = arith.addi %329, %c0_i32_118 : i32
    %c2_i32_119 = arith.constant 2 : i32
    %331 = arith.addi %330, %c2_i32_119 : i32
    %332 = arith.index_cast %331 : i32 to index
    %333 = memref.load %arg3[%332] : memref<108xf32, #tpu.memory_space<smem>>
    %334 = vector.extract_strided_slice %328 {offsets = [0, 0], sizes = [16, 36], strides = [1, 1]} : vector<18x36xf32> to vector<16x36xf32>
    %335 = vector.broadcast %333 : f32 to vector<16x36xf32>
    %336 = arith.mulf %334, %335 : vector<16x36xf32>
    %337 = arith.addf %327, %336 : vector<16x36xf32>
    %c27_i32_120 = arith.constant 27 : i32
    %338 = arith.addi %11, %c27_i32_120 : i32
    %c3_i32_121 = arith.constant 3 : i32
    %339 = arith.addi %338, %c3_i32_121 : i32
    %c2_i32_122 = arith.constant 2 : i32
    %340 = arith.addi %339, %c2_i32_122 : i32
    %341 = arith.index_cast %340 : i32 to index
    %342 = memref.load %arg3[%341] : memref<108xf32, #tpu.memory_space<smem>>
    %343 = vector.extract_strided_slice %328 {offsets = [1, 0], sizes = [16, 36], strides = [1, 1]} : vector<18x36xf32> to vector<16x36xf32>
    %344 = vector.broadcast %342 : f32 to vector<16x36xf32>
    %345 = arith.mulf %343, %344 : vector<16x36xf32>
    %346 = arith.addf %337, %345 : vector<16x36xf32>
    %c27_i32_123 = arith.constant 27 : i32
    %347 = arith.addi %11, %c27_i32_123 : i32
    %c6_i32_124 = arith.constant 6 : i32
    %348 = arith.addi %347, %c6_i32_124 : i32
    %c2_i32_125 = arith.constant 2 : i32
    %349 = arith.addi %348, %c2_i32_125 : i32
    %350 = arith.index_cast %349 : i32 to index
    %351 = memref.load %arg3[%350] : memref<108xf32, #tpu.memory_space<smem>>
    %352 = vector.extract_strided_slice %328 {offsets = [2, 0], sizes = [16, 36], strides = [1, 1]} : vector<18x36xf32> to vector<16x36xf32>
    %353 = vector.broadcast %351 : f32 to vector<16x36xf32>
    %354 = arith.mulf %352, %353 : vector<16x36xf32>
    %355 = arith.addf %346, %354 : vector<16x36xf32>
    %c0_126 = arith.constant 0 : index
    %c0_127 = arith.constant 0 : index
    %c0_128 = arith.constant 0 : index
    %c0_129 = arith.constant 0 : index
    %356 = vector.load %arg5[%c0_126, %c0_127, %c0_128, %c0_129] : memref<1x1x16x36xf32, #tpu.memory_space<vmem>>, vector<1x1x16x36xf32>
    %357 = vector.shape_cast %356 : vector<1x1x16x36xf32> to vector<16x36xf32>
    %358 = vector.shape_cast %355 : vector<16x36xf32> to vector<1x1x16x36xf32>
    tpu.vector_store %arg5[%c0_126, %c0_127, %c0_128, %c0_129], %358 {strides = array<i32>} : memref<1x1x16x36xf32, #tpu.memory_space<vmem>>, vector<1x1x16x36xf32>,
    return
  }
  func.func @transform_0(%arg0: i32, %arg1: i32) -> (i32, i32, i32, i32, i32) {
    %c0_i32 = arith.constant 0 : i32
    %c0_i32_0 = arith.constant 0 : i32
    %c0_i32_1 = arith.constant 0 : i32
    %c0_i32_2 = arith.constant 0 : i32
    return %arg0, %arg1, %c0_i32, %c0_i32_0, %c0_i32_1 : i32, i32, i32, i32, i32
  }
  func.func @transform_1(%arg0: i32, %arg1: i32) -> i32 {
    %c0_i32 = arith.constant 0 : i32
    %c0_i32_0 = arith.constant 0 : i32
    return %c0_i32 : i32
  }
  func.func @transform_2(%arg0: i32, %arg1: i32) -> i32 {
    %c0_i32 = arith.constant 0 : i32
    %c0_i32_0 = arith.constant 0 : i32
    return %c0_i32 : i32
  }
  func.func @transform_3(%arg0: i32, %arg1: i32) -> (i32, i32, i32, i32) {
    %c0_i32 = arith.constant 0 : i32
    %c0_i32_0 = arith.constant 0 : i32
    %c0_i32_1 = arith.constant 0 : i32
    return %arg0, %arg1, %c0_i32, %c0_i32_0 : i32, i32, i32, i32
  }
}

</mosaic_0001>

<llo_original>
// kernel: tpu_custom_call.1
$region0: #{tpu_custom_call.1}
  #allocation0 [shape = 'u32[]', space=smem, size = 0x4, offset = 0x4, fixed_abs, tag = 'smem constant byte address 0x4 - core index']
  #allocation1 [shape = 'u32[144,128]{1,0:T(1,128)}', space=vmem, size = 0x12000, scoped, tag = 'internal scratch']
  #allocation2 [shape = 'f32[4,18,38]{2,1,0:T(8,128)}', space=vmem, size = 0xc000, scoped, tag = 'scratch operand']
  %s0 = inlined_call_operand.hbm [shape: f32[3,2,4,16,16], index: 0, kind: input, shape index: {}]
  %s1 = inlined_call_operand.vmem [shape: f32[108], index: 1, kind: input, shape index: {}]
  %s2 = inlined_call_operand.vmem [shape: f32[3], index: 2, kind: input, shape index: {}]
  %s3 = inlined_call_operand.hbm [shape: f32[3,1,16,36], index: 3, kind: output, shape index: {}]
  %s4 = sld [smem:[#allocation0]]
  $region57: #{tpu_custom_call.1} parent=0
    _
  %s6 = ssub.s32 1, %s4
  %s7 = scalar_select 0, %s6, %s4
  $region1: #{tpu_custom_call.1} parent=0
    #allocation3 [shape = 'u8[131072]{0}', space=vmem, size = 0x20000, scoped, tag = 'input window, operand 0']
    #allocation4 [shape = 's32[2]{0}', space=sflag, size = 0x8, scoped, tag = 'scoped memory for tpu_custom_call.1']
    #allocation5 [shape = 's32[2]{0}', space=sflag, size = 0x8, scoped, tag = 'scoped memory for tpu_custom_call.1']
    #allocation6 [shape = 's32[2]{0}', space=sflag, size = 0x8, scoped, tag = 'scoped memory for tpu_custom_call.1']
    #allocation7 [shape = 'u8[512]{0}', space=smem, size = 0x200, scoped, tag = 'input window, operand 1, single buffered']
    #allocation8 [shape = 'u8[512]{0}', space=smem, size = 0x200, scoped, tag = 'input window, operand 2, single buffered']
    #allocation9 [shape = 's32[1]{0}', space=sflag, size = 0x4, scoped, tag = 'scoped memory for tpu_custom_call.1']
    #allocation10 [shape = 'u8[16384]{0}', space=vmem, size = 0x4000, scoped, tag = 'output window, operand 0']
    %8 = vsyncpa [#allocation4], 0
    %s9 = scalar_lea.sflag [#allocation4], 1
    %10 = vsyncpa %s9, 0
    %11 = vsyncpa [#allocation6], 0
    %12 = vsyncpa [#allocation9], 0
    %13 = vsyncpa [#allocation5], 0
    %s14 = scalar_lea.sflag [#allocation5], 1
    %15 = vsyncpa %s14, 0
    loop: start=0, step=1, limit=5
    $region2: #{tpu_custom_call.1} parent=1 // loop_pre_header
      _
    $region3: #{tpu_custom_call.1} parent=1 // loop_header
      %s17 = sphi 0, %s21
      %p18 = scmp.ge.s32.totalorder %s17, 5
      %s24 = sphi 0, %s36
      %s25 = sphi 0, %s32
      %s26 = sphi 0, %s24
      %s27 = sphi 0, %s25
      %s28 = sphi 0, %s26
      %s29 = sphi 0, %s27
      %s41 = sphi 0, %s43
      %s44 = sphi 0, %s41
      %s45 = sphi 0, %s44
      %s61 = sphi 0, %s45
      %s65 = sphi 0, %s65
      %s67 = sphi 0, %s65
      %s68 = sphi 0, %s67
      %s82 = sphi 0, %s68
      %s86 = sphi 0, %s86
      %s88 = sphi 0, %s86
      %s89 = sphi 0, %s88
      %s103 = sphi 0, %s89
      %s111 = sphi 0, %s113
      %s114 = sphi 0, %s111
      %s115 = sphi 0, %s114
      %s131 = sphi 0, %s115
    $region4: #{tpu_custom_call.1} parent=1 // loop_header_branch
      %20 = sbr.rel (%p18) target = $region8
    $region5: #{tpu_custom_call.1} parent=1 // loop_body
      %s22 = ssub.s32 %s17, 1
      %s23 = ssub.s32 %s17, 2
      %s30 = sadd.s32 1, %s25
      %p31 = scmp.ge.s32.totalorder %s30, 1
      %s32 = scalar_select %p31, 0, %s30
      %s33 = sadd.s32 1, %s24
      %s34 = scalar_select %p31, %s33, %s24
      %p35 = scmp.ge.s32.totalorder %s34, 3
      %s36 = scalar_select %p35, 0, %s34
      %s37 = ssub.s32 %s24, %s36
      %s38 = ssub.s32 %s25, %s32
      %s39 = sor.u32 %s37, %s38
      %p40 = scmp.eq.s32.totalorder %s39, 0
      %s42 = sadd.s32 %s41, 1
      %s43 = scalar_select %p40, %s41, %s42
      %p46 = pneg %p40
      %p47 = scmp.eq.s32.totalorder %s17, 2
      %p48 = por %p46, %p47
      %p49 = scmp.ne.s32.totalorder %s41, %s44
      %p50 = scmp.eq.s32.totalorder %s17, 0
      %p51 = por %p49, %p50
      %p52 = scmp.ne.s32.totalorder %s41, %s44
      %p53 = scmp.eq.s32.totalorder %s22, 2
      %p54 = por %p52, %p53
      %p55 = scmp.ne.s32.totalorder %s44, %s45
      %p56 = scmp.eq.s32.totalorder %s22, 0
      %p57 = por %p55, %p56
      %p58 = scmp.ne.s32.totalorder %s44, %s45
      %p59 = scmp.eq.s32.totalorder %s23, 2
      %p60 = por %p58, %p59
      %p62 = scmp.ne.s32.totalorder %s45, %s61
      %p63 = scmp.eq.s32.totalorder %s23, 0
      %p64 = por %p62, %p63
      %s66 = sadd.s32 %s65, 1
      %p69 = scmp.eq.s32.totalorder %s17, 2
      %p70 = scmp.ne.s32.totalorder %s65, %s67
      %p71 = scmp.eq.s32.totalorder %s17, 0
      %p72 = por %p70, %p71
      %p73 = scmp.ne.s32.totalorder %s65, %s67
      %p74 = scmp.eq.s32.totalorder %s22, 2
      %p75 = por %p73, %p74
      %p76 = scmp.ne.s32.totalorder %s67, %s68
      %p77 = scmp.eq.s32.totalorder %s22, 0
      %p78 = por %p76, %p77
      %p79 = scmp.ne.s32.totalorder %s67, %s68
      %p80 = scmp.eq.s32.totalorder %s23, 2
      %p81 = por %p79, %p80
      %p83 = scmp.ne.s32.totalorder %s68, %s82
      %p84 = scmp.eq.s32.totalorder %s23, 0
      %p85 = por %p83, %p84
      %s87 = sadd.s32 %s86, 1
      %p90 = scmp.eq.s32.totalorder %s17, 2
      %p91 = scmp.ne.s32.totalorder %s86, %s88
      %p92 = scmp.eq.s32.totalorder %s17, 0
      %p93 = por %p91, %p92
      %p94 = scmp.ne.s32.totalorder %s86, %s88
      %p95 = scmp.eq.s32.totalorder %s22, 2
      %p96 = por %p94, %p95
      %p97 = scmp.ne.s32.totalorder %s88, %s89
      %p98 = scmp.eq.s32.totalorder %s22, 0
      %p99 = por %p97, %p98
      %p100 = scmp.ne.s32.totalorder %s88, %s89
      %p101 = scmp.eq.s32.totalorder %s23, 2
      %p102 = por %p100, %p101
      %p104 = scmp.ne.s32.totalorder %s89, %s103
      %p105 = scmp.eq.s32.totalorder %s23, 0
      %p106 = por %p104, %p105
      %s107 = ssub.s32 %s24, %s36
      %s108 = ssub.s32 %s25, %s32
      %s109 = sor.u32 %s107, %s108
      %p110 = scmp.eq.s32.totalorder %s109, 0
      %s112 = sadd.s32 %s111, 1
      %s113 = scalar_select %p110, %s111, %s112
      %p116 = pneg %p110
      %p117 = scmp.eq.s32.totalorder %s17, 2
      %p118 = por %p116, %p117
      %p119 = scmp.ne.s32.totalorder %s111, %s114
      %p120 = scmp.eq.s32.totalorder %s17, 0
      %p121 = por %p119, %p120
      %p122 = scmp.ne.s32.totalorder %s111, %s114
      %p123 = scmp.eq.s32.totalorder %s22, 2
      %p124 = por %p122, %p123
      %p125 = scmp.ne.s32.totalorder %s114, %s115
      %p126 = scmp.eq.s32.totalorder %s22, 0
      %p127 = por %p125, %p126
      %p128 = scmp.ne.s32.totalorder %s114, %s115
      %p129 = scmp.eq.s32.totalorder %s23, 2
      %p130 = por %p128, %p129
      %p132 = scmp.ne.s32.totalorder %s115, %s131
      %p133 = scmp.eq.s32.totalorder %s23, 0
      %p134 = por %p132, %p133
      %p135 = scmp.le.s32.totalorder 1, %s17
      %p136 = scmp.lt.s32.totalorder %s17, 4
      %p137 = pnand %p135, %p136
      %p138 = pneg %p137
      // Predicated region
      $region9: #{tpu_custom_call.1} parent=5 // pred_check
        _
      $region10: #{tpu_custom_call.1} parent=5 // pred_check_branch
        %140 = sbr.rel (%p137) target = $region12
      $region11: #{tpu_custom_call.1} parent=5 // pred_region
        %s141 = ssub.s32 %s17, 1
        // Predicated region
        $region13: #{tpu_custom_call.1} parent=11 // pred_check
          %p142 = pneg %p78
        $region14: #{tpu_custom_call.1} parent=11 // pred_check_branch
          %144 = sbr.rel (%p142) target = $region16
        $region15: #{tpu_custom_call.1} parent=11 // pred_region
          %s146 = ssub.s32 16, 16
          %147 = vsyncadd [#allocation6], %s146
          %s149 = sshll.u32 %s1, 4
          %s150 = int_to_ptr.vmem [resolvable:$true] %s149
          %152 = dma.vmem_to_smem %s150, 16, [#allocation7], [#allocation6]
        $region16: #{tpu_custom_call.1} parent=11 // pred_fallthru
          _
        // Predicated region
        $region17: #{tpu_custom_call.1} parent=11 // pred_check
          %p153 = pneg %p99
        $region18: #{tpu_custom_call.1} parent=11 // pred_check_branch
          %155 = sbr.rel (%p153) target = $region20
        $region19: #{tpu_custom_call.1} parent=11 // pred_region
          %s157 = ssub.s32 16, 16
          %158 = vsyncadd [#allocation9], %s157
          %s160 = sshll.u32 %s2, 4
          %s161 = int_to_ptr.vmem [resolvable:$true] %s160
          %163 = dma.vmem_to_smem %s161, 16, [#allocation8], [#allocation9]
        $region20: #{tpu_custom_call.1} parent=11 // pred_fallthru
          _
      $region12: #{tpu_custom_call.1} parent=5 // pred_fallthru
        _
      %p164 = scmp.lt.s32.totalorder %s17, 3
      // Predicated region
      $region21: #{tpu_custom_call.1} parent=5 // pred_check
        %p165 = pneg %p164
      $region22: #{tpu_custom_call.1} parent=5 // pred_check_branch
        %167 = sbr.rel (%p165) target = $region24
      $region23: #{tpu_custom_call.1} parent=5 // pred_region
        // Predicated region
        $region25: #{tpu_custom_call.1} parent=23 // pred_check
          %p168 = pneg %p51
        $region26: #{tpu_custom_call.1} parent=23 // pred_check_branch
          %170 = sbr.rel (%p168) target = $region28
        $region27: #{tpu_custom_call.1} parent=23 // pred_region
          %s171 = sand.u32 %s41, 1
          %s172 = scalar_lea.sflag [#allocation4], %s171
          %s173 = sand.u32 %s41, 1
          %s174 = smul.addr %s173, 128
          %s175 = scalar_lea.vmem [#allocation3], %s174
          %s176 = smul.u32 2, %s25
          %s178 = ssub.s32 2048, 2048
          %179 = vsyncadd %s172, %s178
          %s180 = smul.addr %s176, 8
          %s181 = smul.addr %s24, 16
          %s182 = sadd.s32 %s180, %s181
          %s183 = smul.addr %s182, 128
          %s184 = scalar_lea.hbm %s0, %s183
          %s185 = sshll.u32 %s175, 4
          %s186 = int_to_ptr.vmem [resolvable:$true] %s185
          %191 = dma.hbm_to_vmem [thread:$0]  %s184, 2048, %s186, %s172, 128, 128, 8
        $region28: #{tpu_custom_call.1} parent=23 // pred_fallthru
          _
      $region24: #{tpu_custom_call.1} parent=5 // pred_fallthru
        _
      %p192 = scmp.le.s32.totalorder 1, %s17
      %p193 = scmp.lt.s32.totalorder %s17, 4
      %p194 = pnand %p192, %p193
      %p195 = pneg %p194
      // Predicated region
      $region29: #{tpu_custom_call.1} parent=5 // pred_check
        _
      $region30: #{tpu_custom_call.1} parent=5 // pred_check_branch
        %197 = sbr.rel (%p194) target = $region32
      $region31: #{tpu_custom_call.1} parent=5 // pred_region
        %s198 = ssub.s32 %s17, 1
        %s199 = sand.u32 %s44, 1
        %s200 = scalar_lea.sflag [#allocation4], %s199
        %s201 = sand.u32 %s44, 1
        %s202 = smul.addr %s201, 128
        %s203 = scalar_lea.vmem [#allocation3], %s202
        // Predicated region
        $region33: #{tpu_custom_call.1} parent=31 // pred_check
          %p204 = pneg %p57
        $region34: #{tpu_custom_call.1} parent=31 // pred_check_branch
          %206 = sbr.rel (%p204) target = $region36
        $region35: #{tpu_custom_call.1} parent=31 // pred_region
          %207 = dma.done %s200, 2048
        $region36: #{tpu_custom_call.1} parent=31 // pred_fallthru
          _
        // Predicated region
        $region37: #{tpu_custom_call.1} parent=31 // pred_check
          %p208 = pneg %p78
        $region38: #{tpu_custom_call.1} parent=31 // pred_check_branch
          %210 = sbr.rel (%p208) target = $region40
        $region39: #{tpu_custom_call.1} parent=31 // pred_region
          %211 = dma.done [#allocation6], 16
        $region40: #{tpu_custom_call.1} parent=31 // pred_fallthru
          _
        // Predicated region
        $region41: #{tpu_custom_call.1} parent=31 // pred_check
          %p212 = pneg %p99
        $region42: #{tpu_custom_call.1} parent=31 // pred_check_branch
          %214 = sbr.rel (%p212) target = $region44
        $region43: #{tpu_custom_call.1} parent=31 // pred_region
          %215 = dma.done [#allocation9], 16
        $region44: #{tpu_custom_call.1} parent=31 // pred_fallthru
          _
        %216 = sfence
        %s217 = sand.u32 %s44, 1
        %s218 = scalar_lea.sflag [#allocation4], %s217
        %s219 = sand.u32 %s44, 1
        %s220 = smul.addr %s219, 128
        %s221 = scalar_lea.vmem [#allocation3], %s220
        %p222 = pneg %p57
        %p223 = pneg %p54
        %p224 = pneg %p78
        %p225 = pneg %p75
        %p226 = pneg %p99
        %p227 = pneg %p96
        %p228 = pneg %p127
        %p229 = pneg %p124
        %s230 = sand.u32 %s114, 1
        %s231 = scalar_lea.sflag [#allocation5], %s230
        %s232 = sand.u32 %s114, 1
        %s233 = smul.addr %s232, 16
        %s234 = scalar_lea.vmem [#allocation10], %s233
        %s235 = smul.u32 2, %s27
        %vm236 = vcmask 310272
        %237 = vst.msk [vmem:[#allocation2] sm:$0xff] %vm236, 0.0
        %238 = vst.msk [vmem:[#allocation2 + $0x8] sm:$0xff] %vm236, 0.0
        %vm239 = vcmask 304128
        %240 = vst.msk [vmem:[#allocation2 + $0x10] sm:$0x3] %vm239, 0.0
        %241 = vst.msk [vmem:[#allocation2 + $0x18] sm:$0xff] %vm236, 0.0
        %242 = vst.msk [vmem:[#allocation2 + $0x20] sm:$0xff] %vm236, 0.0
        %243 = vst.msk [vmem:[#allocation2 + $0x28] sm:$0x3] %vm239, 0.0
        %244 = vst.msk [vmem:[#allocation2 + $0x30] sm:$0xff] %vm236, 0.0
        %245 = vst.msk [vmem:[#allocation2 + $0x38] sm:$0xff] %vm236, 0.0
        %246 = vst.msk [vmem:[#allocation2 + $0x40] sm:$0x3] %vm239, 0.0
        %247 = vst.msk [vmem:[#allocation2 + $0x48] sm:$0xff] %vm236, 0.0
        %248 = vst.msk [vmem:[#allocation2 + $0x50] sm:$0xff] %vm236, 0.0
        %249 = vst.msk [vmem:[#allocation2 + $0x58] sm:$0x3] %vm239, 0.0
        %v250 = vld [vmem:[%s203] sm:$0xff]
        %v251 = vld [vmem:[%s203 + $0x8] sm:$0xff]
        %v252 = vld [vmem:[%s203 + $0x10] sm:$0xff]
        %v253 = vld [vmem:[%s203 + $0x18] sm:$0xff]
        %v254 = vld [vmem:[%s203 + $0x20] sm:$0xff]
        %v255 = vld [vmem:[%s203 + $0x28] sm:$0xff]
        %v256 = vld [vmem:[%s203 + $0x30] sm:$0xff]
        %v257 = vld [vmem:[%s203 + $0x38] sm:$0xff]
        %266 = vrot.lane.b32.xlu0 %v250, 1
        %v267 = vpop.permute.xlu0 %266
        %268 = vrot.lane.b32.xlu0 %v251, 1
        %v269 = vpop.permute.xlu0 %268
        %270 = vrot.lane.b32.xlu0 %v252, 1
        %v271 = vpop.permute.xlu0 %270
        %272 = vrot.lane.b32.xlu0 %v253, 1
        %v273 = vpop.permute.xlu0 %272
        %274 = vrot.lane.b32.xlu0 %v254, 1
        %v275 = vpop.permute.xlu0 %274
        %276 = vrot.lane.b32.xlu0 %v255, 1
        %v277 = vpop.permute.xlu0 %276
        %278 = vrot.lane.b32.xlu0 %v256, 1
        %v279 = vpop.permute.xlu0 %278
        %280 = vrot.lane.b32.xlu0 %v257, 1
        %v281 = vpop.permute.xlu0 %280
        %vm290 = vcmask 138248
        %291 = vst.msk [vmem:[#allocation2 + $0x1] sm:$0xff] %vm290, %v267
        %292 = vst.msk [vmem:[#allocation2 + $0x9] sm:$0xff] %vm290, %v269
        %293 = vst.msk [vmem:[#allocation2 + $0x19] sm:$0xff] %vm290, %v271
        %294 = vst.msk [vmem:[#allocation2 + $0x21] sm:$0xff] %vm290, %v273
        %295 = vst.msk [vmem:[#allocation2 + $0x31] sm:$0xff] %vm290, %v275
        %296 = vst.msk [vmem:[#allocation2 + $0x39] sm:$0xff] %vm290, %v277
        %297 = vst.msk [vmem:[#allocation2 + $0x49] sm:$0xff] %vm290, %v279
        %298 = vst.msk [vmem:[#allocation2 + $0x51] sm:$0xff] %vm290, %v281
        %s299 = scalar_lea.vmem %s203, 64 [#allocation3]
        %v300 = vld [vmem:[%s299] sm:$0xff]
        %v301 = vld [vmem:[%s299 + $0x8] sm:$0xff]
        %v302 = vld [vmem:[%s299 + $0x10] sm:$0xff]
        %v303 = vld [vmem:[%s299 + $0x18] sm:$0xff]
        %v304 = vld [vmem:[%s299 + $0x20] sm:$0xff]
        %v305 = vld [vmem:[%s299 + $0x28] sm:$0xff]
        %v306 = vld [vmem:[%s299 + $0x30] sm:$0xff]
        %v307 = vld [vmem:[%s299 + $0x38] sm:$0xff]
        %316 = vrot.lane.b32.xlu0 %v300, 19
        %v317 = vpop.permute.xlu0 %316
        %318 = vrot.lane.b32.xlu0 %v301, 19
        %v319 = vpop.permute.xlu0 %318
        %320 = vrot.lane.b32.xlu0 %v302, 19
        %v321 = vpop.permute.xlu0 %320
        %322 = vrot.lane.b32.xlu0 %v303, 19
        %v323 = vpop.permute.xlu0 %322
        %324 = vrot.lane.b32.xlu0 %v304, 19
        %v325 = vpop.permute.xlu0 %324
        %326 = vrot.lane.b32.xlu0 %v305, 19
        %v327 = vpop.permute.xlu0 %326
        %328 = vrot.lane.b32.xlu0 %v306, 19
        %v329 = vpop.permute.xlu0 %328
        %330 = vrot.lane.b32.xlu0 %v307, 19
        %v331 = vpop.permute.xlu0 %330
        %vm340 = vcmask 285848
        %341 = vst.msk [vmem:[#allocation2 + $0x1] sm:$0xff] %vm340, %v317
        %342 = vst.msk [vmem:[#allocation2 + $0x9] sm:$0xff] %vm340, %v319
        %343 = vst.msk [vmem:[#allocation2 + $0x19] sm:$0xff] %vm340, %v321
        %344 = vst.msk [vmem:[#allocation2 + $0x21] sm:$0xff] %vm340, %v323
        %345 = vst.msk [vmem:[#allocation2 + $0x31] sm:$0xff] %vm340, %v325
        %346 = vst.msk [vmem:[#allocation2 + $0x39] sm:$0xff] %vm340, %v327
        %347 = vst.msk [vmem:[#allocation2 + $0x49] sm:$0xff] %vm340, %v329
        %348 = vst.msk [vmem:[#allocation2 + $0x51] sm:$0xff] %vm340, %v331
        %s349 = sld [smem:[#allocation8 + %s26]]
        %v350 = vstv %s349
        %s351 = smul.u32 %s26, 36
        %v352 = vld [vmem:[#allocation2] sm:$0xff]
        %v353 = vld [vmem:[#allocation2 + $0x8] sm:$0xff]
        %v354 = vld [vmem:[#allocation2 + $0x10] sm:$0x3]
        %s355 = sld [smem:[#allocation7 + %s351]]
        %v356 = vstv %s355
        %v357 = vmul.f32 %v352, %v356
        %v358 = vmul.f32 %v353, %v356
        %v359 = vadd.f32 %v350, %v357
        %v360 = vadd.f32 %v350, %v358
        %s361 = sadd.s32 %s351, 3
        %s362 = sld [smem:[#allocation7 + %s361]]
        %v363 = vstv %s362
        %v364 = vmul.f32 %v352, %v363
        %v365 = vmul.f32 %v353, %v363
        %v366 = vmul.f32 %v354, %v363
        %vm370 = vcmask 1046528
        %v371 = vrot.slane %v364, 1
        %v372 = vrot.slane %v365, 1
        %v373 = vsel %vm370, %v371, %v372
        %v374 = vrot.slane %v366, 1
        %v375 = vsel %vm370, %v372, %v374
        %v378 = vadd.f32 %v359, %v373
        %v379 = vadd.f32 %v360, %v375
        %s380 = sadd.s32 %s351, 6
        %s381 = sld [smem:[#allocation7 + %s380]]
        %v382 = vstv %s381
        %v383 = vmul.f32 %v352, %v382
        %v384 = vmul.f32 %v353, %v382
        %v385 = vmul.f32 %v354, %v382
        %vm389 = vcmask 1045504
        %v390 = vrot.slane %v383, 2
        %v391 = vrot.slane %v384, 2
        %v392 = vsel %vm389, %v390, %v391
        %v393 = vrot.slane %v385, 2
        %v394 = vsel %vm389, %v391, %v393
        %v397 = vadd.f32 %v378, %v392
        %v398 = vadd.f32 %v379, %v394
        %s399 = sadd.s32 %s351, 1
        %s400 = sld [smem:[#allocation7 + %s399]]
        %v401 = vstv %s400
        %v402 = vmul.f32 %v352, %v401
        %v403 = vmul.f32 %v353, %v401
        %406 = vrot.lane.b32.xlu0 %v402, 127
        %v407 = vpop.permute.xlu0 %406
        %408 = vrot.lane.b32.xlu0 %v403, 127
        %v409 = vpop.permute.xlu0 %408
        %v412 = vadd.f32 %v397, %v407
        %v413 = vadd.f32 %v398, %v409
        %s414 = sadd.s32 %s351, 4
        %s415 = sld [smem:[#allocation7 + %s414]]
        %v416 = vstv %s415
        %v417 = vmul.f32 %v352, %v416
        %v418 = vmul.f32 %v353, %v416
        %v419 = vmul.f32 %v354, %v416
        %v423 = vrot.slane %v417, 1
        %v424 = vrot.slane %v418, 1
        %v425 = vsel %vm370, %v423, %v424
        %v426 = vrot.slane %v419, 1
        %v427 = vsel %vm370, %v424, %v426
        %428 = vrot.lane.b32.xlu0 %v425, 127
        %v429 = vpop.permute.xlu0 %428
        %430 = vrot.lane.b32.xlu0 %v427, 127
        %v431 = vpop.permute.xlu0 %430
        %v434 = vadd.f32 %v412, %v429
        %v435 = vadd.f32 %v413, %v431
        %s436 = sadd.s32 %s351, 7
        %s437 = sld [smem:[#allocation7 + %s436]]
        %v438 = vstv %s437
        %v439 = vmul.f32 %v352, %v438
        %v440 = vmul.f32 %v353, %v438
        %v441 = vmul.f32 %v354, %v438
        %v445 = vrot.slane %v439, 2
        %v446 = vrot.slane %v440, 2
        %v447 = vsel %vm389, %v445, %v446
        %v448 = vrot.slane %v441, 2
        %v449 = vsel %vm389, %v446, %v448
        %450 = vrot.lane.b32.xlu0 %v447, 127
        %v451 = vpop.permute.xlu0 %450
        %452 = vrot.lane.b32.xlu0 %v449, 127
        %v453 = vpop.permute.xlu0 %452
        %v456 = vadd.f32 %v434, %v451
        %v457 = vadd.f32 %v435, %v453
        %s458 = sadd.s32 %s351, 2
        %s459 = sld [smem:[#allocation7 + %s458]]
        %v460 = vstv %s459
        %v461 = vmul.f32 %v352, %v460
        %v462 = vmul.f32 %v353, %v460
        %465 = vrot.lane.b32.xlu0 %v461, 126
        %v466 = vpop.permute.xlu0 %465
        %467 = vrot.lane.b32.xlu0 %v462, 126
        %v468 = vpop.permute.xlu0 %467
        %v471 = vadd.f32 %v456, %v466
        %v472 = vadd.f32 %v457, %v468
        %s473 = sadd.s32 %s351, 5
        %s474 = sld [smem:[#allocation7 + %s473]]
        %v475 = vstv %s474
        %v476 = vmul.f32 %v352, %v475
        %v477 = vmul.f32 %v353, %v475
        %v478 = vmul.f32 %v354, %v475
        %v482 = vrot.slane %v476, 1
        %v483 = vrot.slane %v477, 1
        %v484 = vsel %vm370, %v482, %v483
        %v485 = vrot.slane %v478, 1
        %v486 = vsel %vm370, %v483, %v485
        %487 = vrot.lane.b32.xlu0 %v484, 126
        %v488 = vpop.permute.xlu0 %487
        %489 = vrot.lane.b32.xlu0 %v486, 126
        %v490 = vpop.permute.xlu0 %489
        %v493 = vadd.f32 %v471, %v488
        %v494 = vadd.f32 %v472, %v490
        %s495 = sadd.s32 %s351, 8
        %s496 = sld [smem:[#allocation7 + %s495]]
        %v497 = vstv %s496
        %v498 = vmul.f32 %v352, %v497
        %v499 = vmul.f32 %v353, %v497
        %v500 = vmul.f32 %v354, %v497
        %v504 = vrot.slane %v498, 2
        %v505 = vrot.slane %v499, 2
        %v506 = vsel %vm389, %v504, %v505
        %v507 = vrot.slane %v500, 2
        %v508 = vsel %vm389, %v505, %v507
        %509 = vrot.lane.b32.xlu0 %v506, 126
        %v510 = vpop.permute.xlu0 %509
        %511 = vrot.lane.b32.xlu0 %v508, 126
        %v512 = vpop.permute.xlu0 %511
        %v515 = vadd.f32 %v493, %v510
        %v516 = vadd.f32 %v494, %v512
        %s517 = scalar_lea.vmem [#allocation2], 24
        %v518 = vld [vmem:[%s517] sm:$0xff]
        %v519 = vld [vmem:[%s517 + $0x8] sm:$0xff]
        %v520 = vld [vmem:[%s517 + $0x10] sm:$0x3]
        %s521 = sadd.s32 %s351, 9
        %s522 = sld [smem:[#allocation7 + %s521]]
        %v523 = vstv %s522
        %v524 = vmul.f32 %v518, %v523
        %v525 = vmul.f32 %v519, %v523
        %v526 = vadd.f32 %v515, %v524
        %v527 = vadd.f32 %v516, %v525
        %s528 = sadd.s32 %s351, 12
        %s529 = sld [smem:[#allocation7 + %s528]]
        %v530 = vstv %s529
        %v531 = vmul.f32 %v518, %v530
        %v532 = vmul.f32 %v519, %v530
        %v533 = vmul.f32 %v520, %v530
        %v537 = vrot.slane %v531, 1
        %v538 = vrot.slane %v532, 1
        %v539 = vsel %vm370, %v537, %v538
        %v540 = vrot.slane %v533, 1
        %v541 = vsel %vm370, %v538, %v540
        %v544 = vadd.f32 %v526, %v539
        %v545 = vadd.f32 %v527, %v541
        %s546 = sadd.s32 %s351, 15
        %s547 = sld [smem:[#allocation7 + %s546]]
        %v548 = vstv %s547
        %v549 = vmul.f32 %v518, %v548
        %v550 = vmul.f32 %v519, %v548
        %v551 = vmul.f32 %v520, %v548
        %v555 = vrot.slane %v549, 2
        %v556 = vrot.slane %v550, 2
        %v557 = vsel %vm389, %v555, %v556
        %v558 = vrot.slane %v551, 2
        %v559 = vsel %vm389, %v556, %v558
        %v562 = vadd.f32 %v544, %v557
        %v563 = vadd.f32 %v545, %v559
        %s564 = sadd.s32 %s351, 10
        %s565 = sld [smem:[#allocation7 + %s564]]
        %v566 = vstv %s565
        %v567 = vmul.f32 %v518, %v566
        %v568 = vmul.f32 %v519, %v566
        %571 = vrot.lane.b32.xlu0 %v567, 127
        %v572 = vpop.permute.xlu0 %571
        %573 = vrot.lane.b32.xlu0 %v568, 127
        %v574 = vpop.permute.xlu0 %573
        %v577 = vadd.f32 %v562, %v572
        %v578 = vadd.f32 %v563, %v574
        %s579 = sadd.s32 %s351, 13
        %s580 = sld [smem:[#allocation7 + %s579]]
        %v581 = vstv %s580
        %v582 = vmul.f32 %v518, %v581
        %v583 = vmul.f32 %v519, %v581
        %v584 = vmul.f32 %v520, %v581
        %v588 = vrot.slane %v582, 1
        %v589 = vrot.slane %v583, 1
        %v590 = vsel %vm370, %v588, %v589
        %v591 = vrot.slane %v584, 1
        %v592 = vsel %vm370, %v589, %v591
        %593 = vrot.lane.b32.xlu0 %v590, 127
        %v594 = vpop.permute.xlu0 %593
        %595 = vrot.lane.b32.xlu0 %v592, 127
        %v596 = vpop.permute.xlu0 %595
        %v599 = vadd.f32 %v577, %v594
        %v600 = vadd.f32 %v578, %v596
        %s601 = sadd.s32 %s351, 16
        %s602 = sld [smem:[#allocation7 + %s601]]
        %v603 = vstv %s602
        %v604 = vmul.f32 %v518, %v603
        %v605 = vmul.f32 %v519, %v603
        %v606 = vmul.f32 %v520, %v603
        %v610 = vrot.slane %v604, 2
        %v611 = vrot.slane %v605, 2
        %v612 = vsel %vm389, %v610, %v611
        %v613 = vrot.slane %v606, 2
        %v614 = vsel %vm389, %v611, %v613
        %615 = vrot.lane.b32.xlu0 %v612, 127
        %v616 = vpop.permute.xlu0 %615
        %617 = vrot.lane.b32.xlu0 %v614, 127
        %v618 = vpop.permute.xlu0 %617
        %v621 = vadd.f32 %v599, %v616
        %v622 = vadd.f32 %v600, %v618
        %s623 = sadd.s32 %s351, 11
        %s624 = sld [smem:[#allocation7 + %s623]]
        %v625 = vstv %s624
        %v626 = vmul.f32 %v518, %v625
        %v627 = vmul.f32 %v519, %v625
        %630 = vrot.lane.b32.xlu0 %v626, 126
        %v631 = vpop.permute.xlu0 %630
        %632 = vrot.lane.b32.xlu0 %v627, 126
        %v633 = vpop.permute.xlu0 %632
        %v636 = vadd.f32 %v621, %v631
        %v637 = vadd.f32 %v622, %v633
        %s638 = sadd.s32 %s351, 14
        %s639 = sld [smem:[#allocation7 + %s638]]
        %v640 = vstv %s639
        %v641 = vmul.f32 %v518, %v640
        %v642 = vmul.f32 %v519, %v640
        %v643 = vmul.f32 %v520, %v640
        %v647 = vrot.slane %v641, 1
        %v648 = vrot.slane %v642, 1
        %v649 = vsel %vm370, %v647, %v648
        %v650 = vrot.slane %v643, 1
        %v651 = vsel %vm370, %v648, %v650
        %652 = vrot.lane.b32.xlu0 %v649, 126
        %v653 = vpop.permute.xlu0 %652
        %654 = vrot.lane.b32.xlu0 %v651, 126
        %v655 = vpop.permute.xlu0 %654
        %v658 = vadd.f32 %v636, %v653
        %v659 = vadd.f32 %v637, %v655
        %s660 = sadd.s32 %s351, 17
        %s661 = sld [smem:[#allocation7 + %s660]]
        %v662 = vstv %s661
        %v663 = vmul.f32 %v518, %v662
        %v664 = vmul.f32 %v519, %v662
        %v665 = vmul.f32 %v520, %v662
        %v669 = vrot.slane %v663, 2
        %v670 = vrot.slane %v664, 2
        %v671 = vsel %vm389, %v669, %v670
        %v672 = vrot.slane %v665, 2
        %v673 = vsel %vm389, %v670, %v672
        %674 = vrot.lane.b32.xlu0 %v671, 126
        %v675 = vpop.permute.xlu0 %674
        %676 = vrot.lane.b32.xlu0 %v673, 126
        %v677 = vpop.permute.xlu0 %676
        %v680 = vadd.f32 %v658, %v675
        %v681 = vadd.f32 %v659, %v677
        %s682 = scalar_lea.vmem [#allocation2], 48
        %v683 = vld [vmem:[%s682] sm:$0xff]
        %v684 = vld [vmem:[%s682 + $0x8] sm:$0xff]
        %v685 = vld [vmem:[%s682 + $0x10] sm:$0x3]
        %s686 = sadd.s32 %s351, 18
        %s687 = sld [smem:[#allocation7 + %s686]]
        %v688 = vstv %s687
        %v689 = vmul.f32 %v683, %v688
        %v690 = vmul.f32 %v684, %v688
        %v691 = vadd.f32 %v680, %v689
        %v692 = vadd.f32 %v681, %v690
        %s693 = sadd.s32 %s351, 21
        %s694 = sld [smem:[#allocation7 + %s693]]
        %v695 = vstv %s694
        %v696 = vmul.f32 %v683, %v695
        %v697 = vmul.f32 %v684, %v695
        %v698 = vmul.f32 %v685, %v695
        %v702 = vrot.slane %v696, 1
        %v703 = vrot.slane %v697, 1
        %v704 = vsel %vm370, %v702, %v703
        %v705 = vrot.slane %v698, 1
        %v706 = vsel %vm370, %v703, %v705
        %v709 = vadd.f32 %v691, %v704
        %v710 = vadd.f32 %v692, %v706
        %s711 = sadd.s32 %s351, 24
        %s712 = sld [smem:[#allocation7 + %s711]]
        %v713 = vstv %s712
        %v714 = vmul.f32 %v683, %v713
        %v715 = vmul.f32 %v684, %v713
        %v716 = vmul.f32 %v685, %v713
        %v720 = vrot.slane %v714, 2
        %v721 = vrot.slane %v715, 2
        %v722 = vsel %vm389, %v720, %v721
        %v723 = vrot.slane %v716, 2
        %v724 = vsel %vm389, %v721, %v723
        %v727 = vadd.f32 %v709, %v722
        %v728 = vadd.f32 %v710, %v724
        %s729 = sadd.s32 %s351, 19
        %s730 = sld [smem:[#allocation7 + %s729]]
        %v731 = vstv %s730
        %v732 = vmul.f32 %v683, %v731
        %v733 = vmul.f32 %v684, %v731
        %736 = vrot.lane.b32.xlu0 %v732, 127
        %v737 = vpop.permute.xlu0 %736
        %738 = vrot.lane.b32.xlu0 %v733, 127
        %v739 = vpop.permute.xlu0 %738
        %v742 = vadd.f32 %v727, %v737
        %v743 = vadd.f32 %v728, %v739
        %s744 = sadd.s32 %s351, 22
        %s745 = sld [smem:[#allocation7 + %s744]]
        %v746 = vstv %s745
        %v747 = vmul.f32 %v683, %v746
        %v748 = vmul.f32 %v684, %v746
        %v749 = vmul.f32 %v685, %v746
        %v753 = vrot.slane %v747, 1
        %v754 = vrot.slane %v748, 1
        %v755 = vsel %vm370, %v753, %v754
        %v756 = vrot.slane %v749, 1
        %v757 = vsel %vm370, %v754, %v756
        %758 = vrot.lane.b32.xlu0 %v755, 127
        %v759 = vpop.permute.xlu0 %758
        %760 = vrot.lane.b32.xlu0 %v757, 127
        %v761 = vpop.permute.xlu0 %760
        %v764 = vadd.f32 %v742, %v759
        %v765 = vadd.f32 %v743, %v761
        %s766 = sadd.s32 %s351, 25
        %s767 = sld [smem:[#allocation7 + %s766]]
        %v768 = vstv %s767
        %v769 = vmul.f32 %v683, %v768
        %v770 = vmul.f32 %v684, %v768
        %v771 = vmul.f32 %v685, %v768
        %v775 = vrot.slane %v769, 2
        %v776 = vrot.slane %v770, 2
        %v777 = vsel %vm389, %v775, %v776
        %v778 = vrot.slane %v771, 2
        %v779 = vsel %vm389, %v776, %v778
        %780 = vrot.lane.b32.xlu0 %v777, 127
        %v781 = vpop.permute.xlu0 %780
        %782 = vrot.lane.b32.xlu0 %v779, 127
        %v783 = vpop.permute.xlu0 %782
        %v786 = vadd.f32 %v764, %v781
        %v787 = vadd.f32 %v765, %v783
        %s788 = sadd.s32 %s351, 20
        %s789 = sld [smem:[#allocation7 + %s788]]
        %v790 = vstv %s789
        %v791 = vmul.f32 %v683, %v790
        %v792 = vmul.f32 %v684, %v790
        %795 = vrot.lane.b32.xlu0 %v791, 126
        %v796 = vpop.permute.xlu0 %795
        %797 = vrot.lane.b32.xlu0 %v792, 126
        %v798 = vpop.permute.xlu0 %797
        %v801 = vadd.f32 %v786, %v796
        %v802 = vadd.f32 %v787, %v798
        %s803 = sadd.s32 %s351, 23
        %s804 = sld [smem:[#allocation7 + %s803]]
        %v805 = vstv %s804
        %v806 = vmul.f32 %v683, %v805
        %v807 = vmul.f32 %v684, %v805
        %v808 = vmul.f32 %v685, %v805
        %v812 = vrot.slane %v806, 1
        %v813 = vrot.slane %v807, 1
        %v814 = vsel %vm370, %v812, %v813
        %v815 = vrot.slane %v808, 1
        %v816 = vsel %vm370, %v813, %v815
        %817 = vrot.lane.b32.xlu0 %v814, 126
        %v818 = vpop.permute.xlu0 %817
        %819 = vrot.lane.b32.xlu0 %v816, 126
        %v820 = vpop.permute.xlu0 %819
        %v823 = vadd.f32 %v801, %v818
        %v824 = vadd.f32 %v802, %v820
        %s825 = sadd.s32 %s351, 26
        %s826 = sld [smem:[#allocation7 + %s825]]
        %v827 = vstv %s826
        %v828 = vmul.f32 %v683, %v827
        %v829 = vmul.f32 %v684, %v827
        %v830 = vmul.f32 %v685, %v827
        %v834 = vrot.slane %v828, 2
        %v835 = vrot.slane %v829, 2
        %v836 = vsel %vm389, %v834, %v835
        %v837 = vrot.slane %v830, 2
        %v838 = vsel %vm389, %v835, %v837
        %839 = vrot.lane.b32.xlu0 %v836, 126
        %v840 = vpop.permute.xlu0 %839
        %841 = vrot.lane.b32.xlu0 %v838, 126
        %v842 = vpop.permute.xlu0 %841
        %v845 = vadd.f32 %v823, %v840
        %v846 = vadd.f32 %v824, %v842
        %s847 = scalar_lea.vmem [#allocation2], 72
        %v848 = vld [vmem:[%s847] sm:$0xff]
        %v849 = vld [vmem:[%s847 + $0x8] sm:$0xff]
        %v850 = vld [vmem:[%s847 + $0x10] sm:$0x3]
        %s851 = sadd.s32 %s351, 27
        %s852 = sld [smem:[#allocation7 + %s851]]
        %v853 = vstv %s852
        %v854 = vmul.f32 %v848, %v853
        %v855 = vmul.f32 %v849, %v853
        %v856 = vadd.f32 %v845, %v854
        %v857 = vadd.f32 %v846, %v855
        %s858 = sadd.s32 %s351, 30
        %s859 = sld [smem:[#allocation7 + %s858]]
        %v860 = vstv %s859
        %v861 = vmul.f32 %v848, %v860
        %v862 = vmul.f32 %v849, %v860
        %v863 = vmul.f32 %v850, %v860
        %v867 = vrot.slane %v861, 1
        %v868 = vrot.slane %v862, 1
        %v869 = vsel %vm370, %v867, %v868
        %v870 = vrot.slane %v863, 1
        %v871 = vsel %vm370, %v868, %v870
        %v874 = vadd.f32 %v856, %v869
        %v875 = vadd.f32 %v857, %v871
        %s876 = sadd.s32 %s351, 33
        %s877 = sld [smem:[#allocation7 + %s876]]
        %v878 = vstv %s877
        %v879 = vmul.f32 %v848, %v878
        %v880 = vmul.f32 %v849, %v878
        %v881 = vmul.f32 %v850, %v878
        %v885 = vrot.slane %v879, 2
        %v886 = vrot.slane %v880, 2
        %v887 = vsel %vm389, %v885, %v886
        %v888 = vrot.slane %v881, 2
        %v889 = vsel %vm389, %v886, %v888
        %v892 = vadd.f32 %v874, %v887
        %v893 = vadd.f32 %v875, %v889
        %s894 = sadd.s32 %s351, 28
        %s895 = sld [smem:[#allocation7 + %s894]]
        %v896 = vstv %s895
        %v897 = vmul.f32 %v848, %v896
        %v898 = vmul.f32 %v849, %v896
        %901 = vrot.lane.b32.xlu0 %v897, 127
        %v902 = vpop.permute.xlu0 %901
        %903 = vrot.lane.b32.xlu0 %v898, 127
        %v904 = vpop.permute.xlu0 %903
        %v907 = vadd.f32 %v892, %v902
        %v908 = vadd.f32 %v893, %v904
        %s909 = sadd.s32 %s351, 31
        %s910 = sld [smem:[#allocation7 + %s909]]
        %v911 = vstv %s910
        %v912 = vmul.f32 %v848, %v911
        %v913 = vmul.f32 %v849, %v911
        %v914 = vmul.f32 %v850, %v911
        %v918 = vrot.slane %v912, 1
        %v919 = vrot.slane %v913, 1
        %v920 = vsel %vm370, %v918, %v919
        %v921 = vrot.slane %v914, 1
        %v922 = vsel %vm370, %v919, %v921
        %923 = vrot.lane.b32.xlu0 %v920, 127
        %v924 = vpop.permute.xlu0 %923
        %925 = vrot.lane.b32.xlu0 %v922, 127
        %v926 = vpop.permute.xlu0 %925
        %v929 = vadd.f32 %v907, %v924
        %v930 = vadd.f32 %v908, %v926
        %s931 = sadd.s32 %s351, 34
        %s932 = sld [smem:[#allocation7 + %s931]]
        %v933 = vstv %s932
        %v934 = vmul.f32 %v848, %v933
        %v935 = vmul.f32 %v849, %v933
        %v936 = vmul.f32 %v850, %v933
        %v940 = vrot.slane %v934, 2
        %v941 = vrot.slane %v935, 2
        %v942 = vsel %vm389, %v940, %v941
        %v943 = vrot.slane %v936, 2
        %v944 = vsel %vm389, %v941, %v943
        %945 = vrot.lane.b32.xlu0 %v942, 127
        %v946 = vpop.permute.xlu0 %945
        %947 = vrot.lane.b32.xlu0 %v944, 127
        %v948 = vpop.permute.xlu0 %947
        %v951 = vadd.f32 %v929, %v946
        %v952 = vadd.f32 %v930, %v948
        %s953 = sadd.s32 %s351, 29
        %s954 = sld [smem:[#allocation7 + %s953]]
        %v955 = vstv %s954
        %v956 = vmul.f32 %v848, %v955
        %v957 = vmul.f32 %v849, %v955
        %960 = vrot.lane.b32.xlu0 %v956, 126
        %v961 = vpop.permute.xlu0 %960
        %962 = vrot.lane.b32.xlu0 %v957, 126
        %v963 = vpop.permute.xlu0 %962
        %v966 = vadd.f32 %v951, %v961
        %v967 = vadd.f32 %v952, %v963
        %s968 = sadd.s32 %s351, 32
        %s969 = sld [smem:[#allocation7 + %s968]]
        %v970 = vstv %s969
        %v971 = vmul.f32 %v848, %v970
        %v972 = vmul.f32 %v849, %v970
        %v973 = vmul.f32 %v850, %v970
        %v977 = vrot.slane %v971, 1
        %v978 = vrot.slane %v972, 1
        %v979 = vsel %vm370, %v977, %v978
        %v980 = vrot.slane %v973, 1
        %v981 = vsel %vm370, %v978, %v980
        %982 = vrot.lane.b32.xlu0 %v979, 126
        %v983 = vpop.permute.xlu0 %982
        %984 = vrot.lane.b32.xlu0 %v981, 126
        %v985 = vpop.permute.xlu0 %984
        %v988 = vadd.f32 %v966, %v983
        %v989 = vadd.f32 %v967, %v985
        %s990 = sadd.s32 %s351, 35
        %s991 = sld [smem:[#allocation7 + %s990]]
        %v992 = vstv %s991
        %v993 = vmul.f32 %v848, %v992
        %v994 = vmul.f32 %v849, %v992
        %v995 = vmul.f32 %v850, %v992
        %v999 = vrot.slane %v993, 2
        %v1000 = vrot.slane %v994, 2
        %v1001 = vsel %vm389, %v999, %v1000
        %v1002 = vrot.slane %v995, 2
        %v1003 = vsel %vm389, %v1000, %v1002
        %1004 = vrot.lane.b32.xlu0 %v1001, 126
        %v1005 = vpop.permute.xlu0 %1004
        %1006 = vrot.lane.b32.xlu0 %v1003, 126
        %v1007 = vpop.permute.xlu0 %1006
        %v1010 = vadd.f32 %v988, %v1005
        %v1011 = vadd.f32 %v989, %v1007
        %vm1012 = vcmask 293888
        %1013 = vst.msk [vmem:[%s234] sm:$0xff] %vm1012, %v1010
        %1014 = vst.msk [vmem:[%s234 + $0x8] sm:$0xff] %vm1012, %v1011
        %s1015 = sand.u32 %s114, 1
        %s1016 = scalar_lea.sflag [#allocation5], %s1015
        %s1017 = sand.u32 %s114, 1
        %s1018 = smul.addr %s1017, 16
        %s1019 = scalar_lea.vmem [#allocation10], %s1018
        // Predicated region
        $region45: #{tpu_custom_call.1} parent=31 // pred_check
          %p1020 = pneg %p124
        $region46: #{tpu_custom_call.1} parent=31 // pred_check_branch
          %1022 = sbr.rel (%p1020) target = $region48
        $region47: #{tpu_custom_call.1} parent=31 // pred_region
          %s1024 = ssub.s32 256, 256
          %1025 = vsyncadd %s1016, %s1024
          %s1026 = smul.addr %s27, 2
          %s1027 = smul.addr %s26, 2
          %s1028 = sadd.s32 %s1026, %s1027
          %s1029 = smul.addr %s1028, 128
          %s1030 = scalar_lea.hbm %s3, %s1029
          %s1031 = sshll.u32 %s1019, 4
          %s1032 = int_to_ptr.vmem [resolvable:$true] %s1031
          %1037 = dma.vmem_to_hbm [thread:$0]  %s1032, 256, %s1030, %s1016, 128, 128, 8
        $region48: #{tpu_custom_call.1} parent=31 // pred_fallthru
          _
      $region32: #{tpu_custom_call.1} parent=5 // pred_fallthru
        _
      %p1038 = scmp.le.s32.totalorder 2, %s17
      // Predicated region
      $region49: #{tpu_custom_call.1} parent=5 // pred_check
        %p1039 = pneg %p1038
      $region50: #{tpu_custom_call.1} parent=5 // pred_check_branch
        %1041 = sbr.rel (%p1039) target = $region52
      $region51: #{tpu_custom_call.1} parent=5 // pred_region
        %s1042 = ssub.s32 %s17, 2
        // Predicated region
        $region53: #{tpu_custom_call.1} parent=51 // pred_check
          %p1043 = pneg %p130
        $region54: #{tpu_custom_call.1} parent=51 // pred_check_branch
          %1045 = sbr.rel (%p1043) target = $region56
        $region55: #{tpu_custom_call.1} parent=51 // pred_region
          %s1046 = sand.u32 %s115, 1
          %s1047 = scalar_lea.sflag [#allocation5], %s1046
          %s1048 = sand.u32 %s115, 1
          %s1049 = smul.addr %s1048, 16
          %s1050 = scalar_lea.vmem [#allocation10], %s1049
          %1051 = dma.done %s1047, 256
        $region56: #{tpu_custom_call.1} parent=51 // pred_fallthru
          _
      $region52: #{tpu_custom_call.1} parent=5 // pred_fallthru
        _
    $region6: #{tpu_custom_call.1} parent=1 // loop_footer
      %s21 = sadd.s32 1, %s17
    $region7: #{tpu_custom_call.1} parent=1 // loop_footer_branch
      %16 = sbr.rel target = $region3
    $region8: #{tpu_custom_call.1} parent=1 // loop_exit
      _
    %1052 = vsyncpa [#allocation4], 1
    %s1053 = scalar_lea.sflag [#allocation4], 1
    %1054 = vsyncpa %s1053, 1
    %1055 = vsyncpa [#allocation5], 1
    %s1056 = scalar_lea.sflag [#allocation5], 1
    %1057 = vsyncpa %s1056, 1
    %1058 = vsyncpa [#allocation6], 1
    %s1059 = scalar_lea.sflag [#allocation6], 1
    %1060 = vsyncpa %s1059, 1
    %1061 = vsyncpa [#allocation9], 1

</llo_original>
